<compile_context>
chip_gen: v6e
topology: v6e:2x2x1
jax: 0.10.0
libtpu: 0.0.40
codegen_flags: <defaults>
</compile_context>

<pallas_src>
import math

import jax
import jax.numpy as jnp
from jax.experimental import pallas as pl
from jax.experimental.pallas import tpu as pltpu

_LANES = 1024  # lane-dense last dim: large multiple of 128


def _ncs_kernel(alpha_ref, x_ref, o_ref):
    # alpha is a (1,) scalar in SMEM; one scalar*vreg multiply per tile rides
    # the VPU slot and is fully hidden under the HBM-DMA-bound roofline.
    o_ref[...] = alpha_ref[0] * x_ref[...]


def _pick_tile_rows(rows, lanes, itemsize):
    """Largest row tile whose double-buffered in+out footprint fits VMEM."""
    tile_bytes = 8 << 20  # safe everywhere (v7x has only 64 MiB physical VMEM)
    try:
        info = pltpu.get_tpu_info()
        if info.vmem_capacity_bytes >= (100 << 20):  # v5e / v6e: 128 MiB VMEM
            tile_bytes = 16 << 20
    except Exception:
        pass  # conservative default already chosen
    max_rows = max(8, (tile_bytes // (lanes * itemsize)) // 8 * 8)
    return rows if rows <= max_rows else max_rows


def ncs_forward(x, alpha):
    """Computes NCS.forward: alpha * x, via a tiled Pallas TPU kernel.

    x:     float32 array of any shape (e.g. NCHW)
    alpha: float32 array of shape (1,)
    """
    orig_shape = x.shape
    total = math.prod(orig_shape) if orig_shape else 1
    flat = x.reshape(-1)

    # Lane-dense layout: pad the flat array to a multiple of _LANES and view
    # it as a (rows, _LANES) slab. Padding is at most _LANES-1 elements and is
    # sliced off after the kernel; the op is elementwise so this is pure
    # layout plumbing.
    padded = pl.cdiv(total, _LANES) * _LANES
    if padded != total:
        flat = jnp.pad(flat, (0, padded - total))
    rows = padded // _LANES
    x2d = flat.reshape(rows, _LANES)

    itemsize = jnp.dtype(x2d.dtype).itemsize
    tile_rows = _pick_tile_rows(rows, _LANES, itemsize)
    n_tiles = pl.cdiv(rows, tile_rows)

    # 2 buffers each for the input and output tile, plus headroom.
    tile_bytes = tile_rows * _LANES * itemsize
    vmem_limit = min(4 * tile_bytes + (8 << 20), 100 << 20)

    out2d = pl.pallas_call(
        _ncs_kernel,
        out_shape=jax.ShapeDtypeStruct(x2d.shape, x2d.dtype),
        grid=(n_tiles,),
        in_specs=[
            pl.BlockSpec(memory_space=pltpu.SMEM),                # alpha (1,)
            pl.BlockSpec((tile_rows, _LANES), lambda i: (i, 0)),  # x row tile
        ],
        out_specs=pl.BlockSpec((tile_rows, _LANES), lambda i: (i, 0)),
        compiler_params=pltpu.CompilerParams(
            dimension_semantics=("parallel",),
            vmem_limit_bytes=vmem_limit,
        ),
    )(alpha, x2d)

    out_flat = out2d.reshape(-1)
    if padded != total:
        out_flat = out_flat[:total]
    return out_flat.reshape(orig_shape)


if __name__ == "__main__":
    key = jax.random.PRNGKey(0)
    # Input consistent with a small NCHW tensor: batch=2, channels=4, 16x16.
    x = jax.random.normal(key, (2, 4, 16, 16), dtype=jnp.float32)

    # Deterministic parameter init matching NCS.__init__: alpha = ones(1)
    alpha = jnp.ones((1,), dtype=jnp.float32)

    out = ncs_forward(x, alpha)
    out = jax.block_until_ready(out)

    # Reference check: forward is exactly alpha * x
    ref = alpha * x
    assert out.shape == x.shape
    assert jnp.allclose(out, ref, atol=0.0, rtol=0.0)

    print("KERNEL_OK")
</pallas_src>

<mosaic_0001>
module attributes {stable_mosaic.version = 11 : i64} {
  func.func @_ncs_kernel(%arg0: i32, %arg1: memref<1xf32, #tpu.memory_space<smem>>, %arg2: memref<2x1024xf32, #tpu.memory_space<vmem>>, %arg3: memref<2x1024xf32, #tpu.memory_space<vmem>>) attributes {dimension_semantics = [#tpu.dimension_semantics<parallel>], iteration_bounds = array<i64: 1>, scalar_prefetch = 0 : i64, scratch_operands = 0 : i64, tpu.core_type = #tpu.core_type<tc>, window_params = [{transform_indices = @transform_0, window_bounds = array<i64: 1>}, {transform_indices = @transform_1, window_bounds = array<i64: 2, 1024>}, {transform_indices = @transform_2, window_bounds = array<i64: 2, 1024>}]} {
    %c0 = arith.constant 0 : index
    %0 = memref.load %arg1[%c0] : memref<1xf32, #tpu.memory_space<smem>>
    %c0_0 = arith.constant 0 : index
    %c0_1 = arith.constant 0 : index
    %1 = vector.load %arg2[%c0_0, %c0_1] : memref<2x1024xf32, #tpu.memory_space<vmem>>, vector<2x1024xf32>
    %2 = vector.broadcast %0 : f32 to vector<2x1024xf32>
    %3 = arith.mulf %2, %1 : vector<2x1024xf32>
    %c0_2 = arith.constant 0 : index
    %c0_3 = arith.constant 0 : index
    %4 = vector.load %arg3[%c0_2, %c0_3] : memref<2x1024xf32, #tpu.memory_space<vmem>>, vector<2x1024xf32>
    tpu.vector_store %arg3[%c0_2, %c0_3], %3 {strides = array<i32>} : memref<2x1024xf32, #tpu.memory_space<vmem>>, vector<2x1024xf32>,
    return
  }
  func.func @transform_0(%arg0: i32) -> i32 {
    %c0_i32 = arith.constant 0 : i32
    %c0_i32_0 = arith.constant 0 : i32
    return %c0_i32 : i32
  }
  func.func @transform_1(%arg0: i32) -> (i32, i32) {
    %c0_i32 = arith.constant 0 : i32
    %c0_i32_0 = arith.constant 0 : i32
    return %arg0, %c0_i32 : i32, i32
  }
  func.func @transform_2(%arg0: i32) -> (i32, i32) {
    %c0_i32 = arith.constant 0 : i32
    %c0_i32_0 = arith.constant 0 : i32
    return %arg0, %c0_i32 : i32, i32
  }
}

</mosaic_0001>

<llo_original>
// kernel: tpu_custom_call.1
$region0: #{tpu_custom_call.1}
  #allocation0 [shape = 'u32[]', space=smem, size = 0x4, offset = 0x4, fixed_abs, tag = 'smem constant byte address 0x4 - core index']
  #allocation1 [shape = 'u32[144,128]{1,0:T(1,128)}', space=vmem, size = 0x12000, scoped, tag = 'internal scratch']
  #allocation2 [shape = 'f32[1]{0:T(128)S(6)}', space=smem, size = 0x200, scoped, tag = 'scoped memory for tpu_custom_call.1']
  %s0 = inlined_call_operand.<no memory space> [shape: f32[1], index: 0, kind: input, shape index: {}]
  %s1 = inlined_call_operand.hbm [shape: f32[2,1024], index: 1, kind: input, shape index: {}]
  %s2 = inlined_call_operand.hbm [shape: f32[2,1024], index: 2, kind: output, shape index: {}]
  %s3 = sld [smem:[#allocation0]]
  $region22: #{tpu_custom_call.1} parent=0
    _
  %s5 = ssub.s32 1, %s3
  %s6 = scalar_select 0, %s5, %s3
  %7 = sst [smem:[#allocation2]] %s0
  $region1: #{tpu_custom_call.1} parent=0
    #allocation3 [shape = 'u8[8192]{0}', space=vmem, size = 0x2000, scoped, tag = 'input window, operand 1, single buffered']
    #allocation4 [shape = 's32[1]{0}', space=sflag, size = 0x4, scoped, tag = 'scoped memory for tpu_custom_call.1']
    #allocation5 [shape = 's32[1]{0}', space=sflag, size = 0x4, scoped, tag = 'scoped memory for tpu_custom_call.1']
    #allocation6 [shape = 'u8[8192]{0}', space=vmem, size = 0x2000, scoped, tag = 'output window, operand 0, single buffered']
    %8 = vsyncpa [#allocation4], 0
    %9 = vsyncpa [#allocation5], 0
    // Predicated region
    $region2: #{tpu_custom_call.1} parent=1 // pred_check
      _
    $region3: #{tpu_custom_call.1} parent=1 // pred_check_branch
      %11 = sbr.rel (0) target = $region5
    $region4: #{tpu_custom_call.1} parent=1 // pred_region
      _
    $region5: #{tpu_custom_call.1} parent=1 // pred_fallthru
      _
    // Predicated region
    $region6: #{tpu_custom_call.1} parent=1 // pred_check
      _
    $region7: #{tpu_custom_call.1} parent=1 // pred_check_branch
      %13 = sbr.rel (0) target = $region9
    $region8: #{tpu_custom_call.1} parent=1 // pred_region
      %s15 = ssub.s32 256, 256
      %16 = vsyncadd [#allocation4], %s15
      %s18 = sshll.u32 [#allocation3], 4
      %s19 = int_to_ptr.vmem [resolvable:$true] %s18
      %21 = dma.hbm_to_vmem [thread:$0]  %s1, 256, %s19, [#allocation4]
    $region9: #{tpu_custom_call.1} parent=1 // pred_fallthru
      _
    // Predicated region
    $region10: #{tpu_custom_call.1} parent=1 // pred_check
      _
    $region11: #{tpu_custom_call.1} parent=1 // pred_check_branch
      %23 = sbr.rel (0) target = $region13
    $region12: #{tpu_custom_call.1} parent=1 // pred_region
      %24 = dma.done [#allocation4], 256
    $region13: #{tpu_custom_call.1} parent=1 // pred_fallthru
      _
    %s25 = sld [smem:[#allocation2]]
    %v26 = vld [vmem:[#allocation3] sm:$0xff]
    %v27 = vld [vmem:[#allocation3 + $0x8] sm:$0xff]
    %v28 = vstv %s25
    %v29 = vmul.f32 %v28, %v26
    %v30 = vmul.f32 %v28, %v27
    %31 = vst [vmem:[#allocation6] sm:$0xff] %v29
    %32 = vst [vmem:[#allocation6 + $0x8] sm:$0xff] %v30
    // Predicated region
    $region14: #{tpu_custom_call.1} parent=1 // pred_check
      _
    $region15: #{tpu_custom_call.1} parent=1 // pred_check_branch
      %34 = sbr.rel (0) target = $region17
    $region16: #{tpu_custom_call.1} parent=1 // pred_region
      %s36 = ssub.s32 256, 256
      %37 = vsyncadd [#allocation5], %s36
      %s39 = sshll.u32 [#allocation6], 4
      %s40 = int_to_ptr.vmem [resolvable:$true] %s39
      %42 = dma.vmem_to_hbm [thread:$0]  %s40, 256, %s2, [#allocation5]
    $region17: #{tpu_custom_call.1} parent=1 // pred_fallthru
      _
    // Predicated region
    $region18: #{tpu_custom_call.1} parent=1 // pred_check
      _
    $region19: #{tpu_custom_call.1} parent=1 // pred_check_branch
      %44 = sbr.rel (0) target = $region21
    $region20: #{tpu_custom_call.1} parent=1 // pred_region
      %45 = dma.done [#allocation5], 256
    $region21: #{tpu_custom_call.1} parent=1 // pred_fallthru
      _
    %46 = vsyncpa [#allocation4], 1
    %47 = vsyncpa [#allocation5], 1

</llo_original>
